<compile_context>
chip_gen: v7x
topology: tpu7x:2x2x1
jax: 0.10.0
libtpu: 0.0.40
codegen_flags: <defaults>
</compile_context>

<pallas_src>
import functools

import jax
import jax.numpy as jnp
import numpy as np
from jax import lax
from jax.experimental import pallas as pl
from jax.experimental.pallas import tpu as pltpu

_WSCALE_GAIN = np.sqrt(2.0)
_EPS = 1e-8
_LRELU_SLOPE = 0.2


def _conv_block_kernel(x_ref, halo_ref, w_ref, b_ref, o_ref, *, W):
    """One (batch n, row-tile t) grid step.

    x_ref   : (1, Cin, TH*W)     main tile, rows [t*TH, t*TH+TH), row-major flat
    halo_ref: (1, 1, Cin, 2*W)   [row above | row below] (zeros at image border)
    w_ref   : (Cout, 9*Cin)      bf16, wscale folded, K ordering (ky, kx, ci)
    b_ref   : (Cout, 1)          f32
    o_ref   : (1, Cout, TH*W)    NCHW-flat output tile (lane-dense)
    """
    Cin = x_ref.shape[1]
    L = x_ref.shape[2]                              # TH * W
    # Lane-aligned left/right zero pad (>= W + 1) so all tap windows are
    # in-bounds static slices and the main tile lands at a 128-aligned offset.
    PADW = ((W + 1 + 127) // 128) * 128

    xm = x_ref[0].astype(jnp.float32)               # (Cin, L)
    halo = halo_ref[0, 0].astype(jnp.float32)       # (Cin, 2*W)
    top = halo[:, :W]                               # row above the tile
    bot = halo[:, W:]                               # row below the tile
    zpad = jnp.zeros((Cin, PADW - W), jnp.float32)

    # [0-pad | top row | main rows | bottom row | 0-pad]; the (big) main piece
    # is placed at lane offset PADW (multiple of 128) -> aligned placement.
    ext = jnp.concatenate([zpad, top, xm, bot, zpad], axis=-1)  # (Cin, L+2*PADW)

    # PixelNorm over channels, computed once for the whole extended tile
    # (sublane reduce -> XLU, rsqrt -> EUP); bf16 for the MXU operands.
    ms = jnp.mean(ext * ext, axis=0, keepdims=True)
    xb = (ext * lax.rsqrt(ms + _EPS)).astype(jnp.bfloat16)

    # Column masks: the flat layout has no horizontal zero pad, so a +-1
    # column shift must not leak values from the neighbouring row.
    col = lax.broadcasted_iota(jnp.int32, (1, L), 1) % W
    mask_l = (col >= 1).astype(jnp.bfloat16)        # kx = 0 taps (read col c-1)
    mask_r = (col <= W - 2).astype(jnp.bfloat16)    # kx = 2 taps (read col c+1)

    # im2col: 9 static lane-offset slices (XLU rotates), masked, stacked along
    # the sublane axis -> a single fused (Cout, 9*Cin) x (9*Cin, L) matmul.
    taps = []
    for ky in range(3):
        for kx in range(3):
            start = PADW + (ky - 1) * W + (kx - 1)
            tap = xb[:, start:start + L]            # (Cin, L)
            if kx == 0:
                tap = tap * mask_l
            elif kx == 2:
                tap = tap * mask_r
            taps.append(tap)
    rhs = jnp.concatenate(taps, axis=0)             # (9*Cin, L) bf16

    # Transposed matmul: TH*W on the MXU output (lane) dim, Cout on sublanes;
    # f32 accumulation held in vregs (no VMEM scratch round trip).
    acc = jnp.dot(w_ref[...], rhs, preferred_element_type=jnp.float32)  # (Cout, L)

    # Lane-dense epilogue: bias + LeakyReLU(0.2) + cast, one unmasked store.
    y = acc + b_ref[...]
    y = jnp.where(y >= 0.0, y, _LRELU_SLOPE * y)
    o_ref[0] = y.astype(o_ref.dtype)


def _pick_row_tile(H, W, N, row_tile):
    """Largest valid tile height <= row_tile; keeps >=2 grid steps if possible."""
    cands = [th for th in range(1, H + 1)
             if H % th == 0 and ((th * W) % 128 == 0 or th == H)]
    le = [th for th in cands if th <= row_tile]
    th = max(le) if le else min(cands)
    if N * (H // th) < 2:            # v7x: two TensorCores share the grid
        smaller = [c for c in cands if c < th]
        if smaller:
            th = max(smaller)
    return th


@functools.partial(jax.jit, static_argnames=("upsample", "row_tile"))
def conv_block_forward(x, weight, bias, wscale, upsample=False, row_tile=64):
    """x: (N, Cin, H, W), NCHW -- same as the PyTorch module."""
    N, Cin, H, W = x.shape
    Cout, wCin, KH, KW = weight.shape
    assert wCin == Cin and KH == 3 and KW == 3, "kernel specialised to 3x3 / s1 / p1"
    # TODO(synk): fused_scale=True (conv_transpose2d) path not implemented.

    if upsample:
        # Nearest-neighbor 2x upsample; commutes exactly with PixelNorm.
        x = jnp.repeat(jnp.repeat(x, 2, axis=2), 2, axis=3)
        H, W = H * 2, W * 2

    TH = _pick_row_tile(H, W, N, row_tile)
    T = H // TH
    L = TH * W

    # NCHW already has channels on sublanes / spatial on lanes for the
    # transposed matmul: the main activation needs no transpose/pad copy.
    x_flat = x.reshape(N, Cin, H * W)

    # Per-tile halo rows (1 above + 1 below; zeros at the image borders),
    # packed as (N, T, Cin, 2*W) = [top | bottom].  Tiny compared to x.
    xr = x.reshape(N, Cin, T, TH, W)
    zrow = jnp.zeros((N, Cin, 1, W), x.dtype)
    top = jnp.concatenate([zrow, xr[:, :, :T - 1, TH - 1, :]], axis=2)
    bot = jnp.concatenate([xr[:, :, 1:, 0, :], zrow], axis=2)
    halo = jnp.transpose(jnp.concatenate([top, bot], axis=-1), (0, 2, 1, 3))

    # (Cout, Cin, 3, 3) -> (Cout, 9*Cin) with K ordering (ky, kx, ci);
    # wscale folded in, bf16 MXU operands, f32 accumulation in the kernel.
    w2 = (jnp.transpose(weight * wscale, (0, 2, 3, 1))
          .reshape(Cout, KH * KW * Cin).astype(jnp.bfloat16))
    b2 = bias.reshape(Cout, 1).astype(jnp.float32)

    # Explicit VMEM budget (generous): double-buffered I/O + in-kernel temps.
    xbytes = x.dtype.itemsize
    PADW = ((W + 1 + 127) // 128) * 128
    est = (2 * Cin * L * xbytes + 2 * Cin * 2 * W * xbytes
           + 2 * Cout * L * 4 + Cout * KH * KW * Cin * 2 + Cout * 4
           + Cin * (L + 2 * PADW) * 6 + KH * KW * Cin * L * 4 + Cout * L * 8)
    vmem_limit = int(min(max(2 * est, 32 * 2 ** 20), 64 * 2 ** 20))

    out_flat = pl.pallas_call(
        functools.partial(_conv_block_kernel, W=W),
        out_shape=jax.ShapeDtypeStruct((N, Cout, H * W), x.dtype),
        grid=(N, T),
        in_specs=[
            pl.BlockSpec((1, Cin, L), lambda n, t: (n, 0, t)),
            pl.BlockSpec((1, 1, Cin, 2 * W), lambda n, t: (n, t, 0, 0)),
            pl.BlockSpec((Cout, KH * KW * Cin), lambda n, t: (0, 0)),
            pl.BlockSpec((Cout, 1), lambda n, t: (0, 0)),
        ],
        out_specs=pl.BlockSpec((1, Cout, L), lambda n, t: (n, 0, t)),
        compiler_params=pltpu.CompilerParams(
            dimension_semantics=("parallel", "parallel"),
            vmem_limit_bytes=vmem_limit),
    )(x_flat, halo, w2, b2)

    return out_flat.reshape(N, Cout, H, W)   # free reshape; already NCHW


def _reference_forward(x, weight, bias, wscale, upsample=False):
    """Exact f32 reference mirroring the PyTorch forward (NCHW)."""
    norm = jnp.sqrt(jnp.mean(x * x, axis=1, keepdims=True) + _EPS)
    xn = x / norm
    if upsample:
        xn = jnp.repeat(jnp.repeat(xn, 2, axis=2), 2, axis=3)
    w = weight * wscale
    y = lax.conv_general_dilated(
        xn, w, window_strides=(1, 1), padding=((1, 1), (1, 1)),
        dimension_numbers=("NCHW", "OIHW", "NCHW"),
        precision=lax.Precision.HIGHEST)
    y = y + bias[None, :, None, None]
    return jnp.where(y >= 0.0, y, _LRELU_SLOPE * y)


def _reference_forward_bf16(x, weight, bias, wscale, upsample=False):
    """Reference with the same bf16 MXU-operand quantization as the kernel."""
    xn = x * lax.rsqrt(jnp.mean(x * x, axis=1, keepdims=True) + _EPS)
    if upsample:
        xn = jnp.repeat(jnp.repeat(xn, 2, axis=2), 2, axis=3)
    xn = xn.astype(jnp.bfloat16).astype(jnp.float32)
    w = (weight * wscale).astype(jnp.bfloat16).astype(jnp.float32)
    y = lax.conv_general_dilated(
        xn, w, window_strides=(1, 1), padding=((1, 1), (1, 1)),
        dimension_numbers=("NCHW", "OIHW", "NCHW"),
        precision=lax.Precision.HIGHEST)
    y = y + bias[None, :, None, None]
    return jnp.where(y >= 0.0, y, _LRELU_SLOPE * y)


if __name__ == "__main__":
    # Module config: in_channels=4, out_channels=8, kernel_size=3.
    N, Cin, Cout, H, W, K = 2, 4, 8, 16, 16, 3

    key = jax.random.PRNGKey(0)
    kx_key, kw_key, kb_key = jax.random.split(key, 3)
    x = jax.random.normal(kx_key, (N, Cin, H, W), dtype=jnp.float32)
    weight = jax.random.normal(kw_key, (Cout, Cin, K, K), dtype=jnp.float32)
    # Module init is zeros(bias); use a small random bias to exercise the add.
    bias = 0.1 * jax.random.normal(kb_key, (Cout,), dtype=jnp.float32)
    wscale = jnp.float32(_WSCALE_GAIN / np.sqrt(K * K * Cin))

    # row_tile=8 -> grid (2, 2): exercises interior + border halo tiles.
    out = jax.block_until_ready(
        conv_block_forward(x, weight, bias, wscale, row_tile=8))
    assert out.shape == (N, Cout, H, W)

    # Tight check vs a reference with identical bf16 MXU-operand quantization.
    ref_q = jax.block_until_ready(_reference_forward_bf16(x, weight, bias, wscale))
    np.testing.assert_allclose(np.asarray(out), np.asarray(ref_q),
                               rtol=1e-3, atol=1e-3)

    # Loose check vs the exact f32 PyTorch-equivalent forward.
    ref = jax.block_until_ready(_reference_forward(x, weight, bias, wscale))
    np.testing.assert_allclose(np.asarray(out), np.asarray(ref),
                               rtol=5e-2, atol=5e-2)

    # Upsample path (wrapper-level nearest 2x; same kernel).
    out_up = jax.block_until_ready(
        conv_block_forward(x, weight, bias, wscale, upsample=True, row_tile=8))
    ref_up = jax.block_until_ready(
        _reference_forward_bf16(x, weight, bias, wscale, upsample=True))
    np.testing.assert_allclose(np.asarray(out_up), np.asarray(ref_up),
                               rtol=1e-3, atol=1e-3)

    print("KERNEL_OK")
</pallas_src>

<mosaic_0001>
module attributes {stable_mosaic.version = 11 : i64} {
  func.func @_conv_block_kernel(%arg0: i32, %arg1: i32, %arg2: memref<1x4x128xf32, #tpu.memory_space<vmem>>, %arg3: memref<1x1x4x32xf32, #tpu.memory_space<vmem>>, %arg4: memref<8x36xbf16, #tpu.memory_space<vmem>>, %arg5: memref<8x1xf32, #tpu.memory_space<vmem>>, %arg6: memref<1x8x128xf32, #tpu.memory_space<vmem>>) attributes {dimension_semantics = [#tpu.dimension_semantics<parallel>, #tpu.dimension_semantics<parallel>], iteration_bounds = array<i64: 2, 2>, scalar_prefetch = 0 : i64, scratch_operands = 0 : i64, tpu.core_type = #tpu.core_type<tc>, window_params = [{transform_indices = @transform_0, window_bounds = array<i64: 1, 4, 128>}, {transform_indices = @transform_1, window_bounds = array<i64: 1, 1, 4, 32>}, {pipeline_mode = #tpu.pipeline_mode<synchronous>, transform_indices = @transform_2, window_bounds = array<i64: 8, 36>}, {pipeline_mode = #tpu.pipeline_mode<synchronous>, transform_indices = @transform_3, window_bounds = array<i64: 8, 1>}, {transform_indices = @transform_4, window_bounds = array<i64: 1, 8, 128>}]} {
    %c0 = arith.constant 0 : index
    %c0_0 = arith.constant 0 : index
    %c0_1 = arith.constant 0 : index
    %0 = vector.load %arg2[%c0, %c0_0, %c0_1] : memref<1x4x128xf32, #tpu.memory_space<vmem>>, vector<1x4x128xf32>
    %1 = vector.shape_cast %0 : vector<1x4x128xf32> to vector<4x128xf32>
    %c0_2 = arith.constant 0 : index
    %c0_3 = arith.constant 0 : index
    %c0_4 = arith.constant 0 : index
    %c0_5 = arith.constant 0 : index
    %2 = vector.load %arg3[%c0_2, %c0_3, %c0_4, %c0_5] : memref<1x1x4x32xf32, #tpu.memory_space<vmem>>, vector<1x1x4x32xf32>
    %3 = vector.shape_cast %2 : vector<1x1x4x32xf32> to vector<4x32xf32>
    %4 = vector.extract_strided_slice %3 {offsets = [0, 0], sizes = [4, 16], strides = [1, 1]} : vector<4x32xf32> to vector<4x16xf32>
    %5 = vector.extract_strided_slice %3 {offsets = [0, 16], sizes = [4, 16], strides = [1, 1]} : vector<4x32xf32> to vector<4x16xf32>
    %cst = arith.constant 0.000000e+00 : f32
    %6 = vector.broadcast %cst : f32 to vector<4x112xf32>
    %7 = tpu.concatenate %6, %4, %1, %5, %6 in 1 : vector<4x112xf32>, vector<4x16xf32>, vector<4x128xf32>, vector<4x16xf32>, vector<4x112xf32> -> vector<4x384xf32>
    %8 = arith.mulf %7, %7 : vector<4x384xf32>
    %cst_6 = arith.constant dense<0.000000e+00> : vector<384xf32>
    %9 = vector.multi_reduction <add>, %8, %cst_6 [0] : vector<4x384xf32> to vector<384xf32>
    %10 = vector.shape_cast %9 : vector<384xf32> to vector<1x384xf32>
    %cst_7 = arith.constant 4.000000e+00 : f32
    %11 = vector.broadcast %cst_7 : f32 to vector<1x384xf32>
    %12 = arith.divf %10, %11 : vector<1x384xf32>
    %cst_8 = arith.constant 9.99999993E-9 : f32
    %13 = vector.broadcast %cst_8 : f32 to vector<1x384xf32>
    %14 = arith.addf %12, %13 : vector<1x384xf32>
    %15 = math.rsqrt %14 : vector<1x384xf32>
    %16 = vector.broadcast %15 : vector<1x384xf32> to vector<4x384xf32>
    %17 = arith.mulf %7, %16 : vector<4x384xf32>
    %18 = arith.truncf %17 : vector<4x384xf32> to vector<4x384xbf16>
    %19 = tpu.iota {dimensions = array<i32: 1>} : vector<1x128xi32>
    %c16_i32 = arith.constant 16 : i32
    %c0_i32 = arith.constant 0 : i32
    %20 = arith.cmpi eq, %c16_i32, %c0_i32 : i32
    %c1_i32 = arith.constant 1 : i32
    %21 = arith.select %20, %c1_i32, %c16_i32 : i32
    %22 = vector.broadcast %21 : i32 to vector<1x128xi32>
    %23 = arith.remsi %19, %22 : vector<1x128xi32>
    %c0_i32_9 = arith.constant 0 : i32
    %24 = vector.broadcast %c0_i32_9 : i32 to vector<1x128xi32>
    %25 = arith.cmpi ne, %23, %24 : vector<1x128xi32>
    %c0_i32_10 = arith.constant 0 : i32
    %26 = vector.broadcast %c0_i32_10 : i32 to vector<1x128xi32>
    %27 = arith.cmpi slt, %23, %26 : vector<1x128xi32>
    %c0_i32_11 = arith.constant 0 : i32
    %28 = arith.cmpi slt, %21, %c0_i32_11 : i32
    %29 = vector.broadcast %28 : i1 to vector<1x128xi1>
    %30 = vector.broadcast %29 : vector<1x128xi1> to vector<1x128xi1>
    %31 = arith.xori %27, %30 : vector<1x128xi1>
    %32 = arith.andi %31, %25 : vector<1x128xi1>
    %33 = vector.broadcast %21 : i32 to vector<1x128xi32>
    %34 = arith.addi %23, %33 : vector<1x128xi32>
    %35 = arith.select %32, %34, %23 : vector<1x128xi1>, vector<1x128xi32>
    %c1_i32_12 = arith.constant 1 : i32
    %36 = vector.broadcast %c1_i32_12 : i32 to vector<1x128xi32>
    %37 = arith.cmpi sge, %35, %36 : vector<1x128xi32>
    %38 = arith.extui %37 : vector<1x128xi1> to vector<1x128xi32>
    %39 = arith.sitofp %38 : vector<1x128xi32> to vector<1x128xf32>
    %40 = arith.truncf %39 : vector<1x128xf32> to vector<1x128xbf16>
    %c14_i32 = arith.constant 14 : i32
    %41 = vector.broadcast %c14_i32 : i32 to vector<1x128xi32>
    %42 = arith.cmpi sle, %35, %41 : vector<1x128xi32>
    %43 = arith.extui %42 : vector<1x128xi1> to vector<1x128xi32>
    %44 = arith.sitofp %43 : vector<1x128xi32> to vector<1x128xf32>
    %45 = arith.truncf %44 : vector<1x128xf32> to vector<1x128xbf16>
    %46 = vector.extract_strided_slice %18 {offsets = [0, 111], sizes = [4, 128], strides = [1, 1]} : vector<4x384xbf16> to vector<4x128xbf16>
    %47 = vector.broadcast %40 : vector<1x128xbf16> to vector<4x128xbf16>
    %48 = arith.mulf %46, %47 : vector<4x128xbf16>
    %49 = vector.extract_strided_slice %18 {offsets = [0, 112], sizes = [4, 128], strides = [1, 1]} : vector<4x384xbf16> to vector<4x128xbf16>
    %50 = vector.extract_strided_slice %18 {offsets = [0, 113], sizes = [4, 128], strides = [1, 1]} : vector<4x384xbf16> to vector<4x128xbf16>
    %51 = vector.broadcast %45 : vector<1x128xbf16> to vector<4x128xbf16>
    %52 = arith.mulf %50, %51 : vector<4x128xbf16>
    %53 = vector.extract_strided_slice %18 {offsets = [0, 127], sizes = [4, 128], strides = [1, 1]} : vector<4x384xbf16> to vector<4x128xbf16>
    %54 = vector.broadcast %40 : vector<1x128xbf16> to vector<4x128xbf16>
    %55 = arith.mulf %53, %54 : vector<4x128xbf16>
    %56 = vector.extract_strided_slice %18 {offsets = [0, 128], sizes = [4, 128], strides = [1, 1]} : vector<4x384xbf16> to vector<4x128xbf16>
    %57 = vector.extract_strided_slice %18 {offsets = [0, 129], sizes = [4, 128], strides = [1, 1]} : vector<4x384xbf16> to vector<4x128xbf16>
    %58 = vector.broadcast %45 : vector<1x128xbf16> to vector<4x128xbf16>
    %59 = arith.mulf %57, %58 : vector<4x128xbf16>
    %60 = vector.extract_strided_slice %18 {offsets = [0, 143], sizes = [4, 128], strides = [1, 1]} : vector<4x384xbf16> to vector<4x128xbf16>
    %61 = vector.broadcast %40 : vector<1x128xbf16> to vector<4x128xbf16>
    %62 = arith.mulf %60, %61 : vector<4x128xbf16>
    %63 = vector.extract_strided_slice %18 {offsets = [0, 144], sizes = [4, 128], strides = [1, 1]} : vector<4x384xbf16> to vector<4x128xbf16>
    %64 = vector.extract_strided_slice %18 {offsets = [0, 145], sizes = [4, 128], strides = [1, 1]} : vector<4x384xbf16> to vector<4x128xbf16>
    %65 = vector.broadcast %45 : vector<1x128xbf16> to vector<4x128xbf16>
    %66 = arith.mulf %64, %65 : vector<4x128xbf16>
    %67 = tpu.concatenate %48, %49, %52, %55, %56, %59, %62, %63, %66 in 0 : vector<4x128xbf16>, vector<4x128xbf16>, vector<4x128xbf16>, vector<4x128xbf16>, vector<4x128xbf16>, vector<4x128xbf16>, vector<4x128xbf16>, vector<4x128xbf16>, vector<4x128xbf16> -> vector<36x128xbf16>
    %c0_13 = arith.constant 0 : index
    %c0_14 = arith.constant 0 : index
    %68 = vector.load %arg4[%c0_13, %c0_14] : memref<8x36xbf16, #tpu.memory_space<vmem>>, vector<8x36xbf16>
    %cst_15 = arith.constant dense<0.000000e+00> : vector<8x128xf32>
    %69 = tpu.matmul %68, %67, %cst_15 {dimension_numbers = #tpu.dot_dimension_numbers<[1], [0], [0], [1], [0, 0, 1, 1], [], []>} : vector<8x36xbf16>, vector<36x128xbf16>, vector<8x128xf32> -> vector<8x128xf32>
    %c0_16 = arith.constant 0 : index
    %c0_17 = arith.constant 0 : index
    %70 = vector.load %arg5[%c0_16, %c0_17] : memref<8x1xf32, #tpu.memory_space<vmem>>, vector<8x1xf32>
    %71 = vector.broadcast %70 : vector<8x1xf32> to vector<8x128xf32>
    %72 = arith.addf %69, %71 : vector<8x128xf32>
    %cst_18 = arith.constant 0.000000e+00 : f32
    %73 = vector.broadcast %cst_18 : f32 to vector<8x128xf32>
    %74 = arith.cmpf oge, %72, %73 : vector<8x128xf32>
    %cst_19 = arith.constant 2.000000e-01 : f32
    %75 = vector.broadcast %cst_19 : f32 to vector<8x128xf32>
    %76 = arith.mulf %75, %72 : vector<8x128xf32>
    %77 = arith.select %74, %72, %76 : vector<8x128xi1>, vector<8x128xf32>
    %c0_20 = arith.constant 0 : index
    %c0_21 = arith.constant 0 : index
    %c0_22 = arith.constant 0 : index
    %78 = vector.load %arg6[%c0_20, %c0_21, %c0_22] : memref<1x8x128xf32, #tpu.memory_space<vmem>>, vector<1x8x128xf32>
    %79 = vector.shape_cast %78 : vector<1x8x128xf32> to vector<8x128xf32>
    %80 = vector.shape_cast %77 : vector<8x128xf32> to vector<1x8x128xf32>
    tpu.vector_store %arg6[%c0_20, %c0_21, %c0_22], %80 {strides = array<i32>} : memref<1x8x128xf32, #tpu.memory_space<vmem>>, vector<1x8x128xf32>,
    return
  }
  func.func @transform_0(%arg0: i32, %arg1: i32) -> (i32, i32, i32) {
    %c0_i32 = arith.constant 0 : i32
    %c0_i32_0 = arith.constant 0 : i32
    return %arg0, %c0_i32, %arg1 : i32, i32, i32
  }
  func.func @transform_1(%arg0: i32, %arg1: i32) -> (i32, i32, i32, i32) {
    %c0_i32 = arith.constant 0 : i32
    %c0_i32_0 = arith.constant 0 : i32
    %c0_i32_1 = arith.constant 0 : i32
    return %arg0, %arg1, %c0_i32, %c0_i32_0 : i32, i32, i32, i32
  }
  func.func @transform_2(%arg0: i32, %arg1: i32) -> (i32, i32) {
    %c0_i32 = arith.constant 0 : i32
    %c0_i32_0 = arith.constant 0 : i32
    %c0_i32_1 = arith.constant 0 : i32
    return %c0_i32, %c0_i32_0 : i32, i32
  }
  func.func @transform_3(%arg0: i32, %arg1: i32) -> (i32, i32) {
    %c0_i32 = arith.constant 0 : i32
    %c0_i32_0 = arith.constant 0 : i32
    %c0_i32_1 = arith.constant 0 : i32
    return %c0_i32, %c0_i32_0 : i32, i32
  }
  func.func @transform_4(%arg0: i32, %arg1: i32) -> (i32, i32, i32) {
    %c0_i32 = arith.constant 0 : i32
    %c0_i32_0 = arith.constant 0 : i32
    return %arg0, %c0_i32, %arg1 : i32, i32, i32
  }
}

</mosaic_0001>

<llo_original>
// kernel: conv_block_forward.1
$region0: #{conv_block_forward.1}
  #allocation0 [shape = 'u32[]', space=smem, size = 0x4, offset = 0x4, fixed_abs, tag = 'smem constant byte address 0x4 - core index']
  #allocation1 [shape = 'u32[144,128]{1,0:T(1,128)}', space=vmem, size = 0x12000, scoped, tag = 'internal scratch']
  %s0 = inlined_call_operand.vmem [shape: f32[2,4,256], index: 0, kind: input, shape index: {}]
  %s1 = inlined_call_operand.vmem [shape: f32[2,2,4,32], index: 1, kind: input, shape index: {}]
  %s2 = inlined_call_operand.vmem [shape: bf16[8,36], index: 2, kind: input, shape index: {}]
  %s3 = inlined_call_operand.vmem [shape: f32[8,1], index: 3, kind: input, shape index: {}]
  %s4 = inlined_call_operand.vmem [shape: f32[2,8,256], index: 4, kind: output, shape index: {}]
  %s5 = sld [smem:[#allocation0]]
  $region49: #{conv_block_forward.1} parent=0
    _
  %s7 = ssub.s32 1, %s5
  %s8 = scalar_select 0, %s7, %s5
  loop: start=0, step=1, limit=6
  $region2: #{conv_block_forward.1} parent=0 // loop_pre_header
    _
  $region3: #{conv_block_forward.1} parent=0 // loop_header
    %s10 = sphi 0, %s14
    %p11 = scmp.ge.s32.totalorder %s10, 6
    %s17 = sphi 0, %s29
    %s18 = sphi 0, %s25
    %s19 = sphi 0, %s17
    %s20 = sphi 0, %s18
    %s21 = sphi 0, %s19
    %s22 = sphi 0, %s20
    %s34 = sphi 0, %s36
    %s37 = sphi 0, %s34
    %s38 = sphi 0, %s37
    %s54 = sphi 0, %s38
    %s62 = sphi 0, %s64
    %s65 = sphi 0, %s62
    %s66 = sphi 0, %s65
    %s82 = sphi 0, %s66
    %s86 = sphi 0, %s86
    %s88 = sphi 0, %s86
    %s89 = sphi 0, %s88
    %s103 = sphi 0, %s89
    %s107 = sphi 0, %s107
    %s109 = sphi 0, %s107
    %s110 = sphi 0, %s109
    %s124 = sphi 0, %s110
    %s132 = sphi 0, %s134
    %s135 = sphi 0, %s132
    %s136 = sphi 0, %s135
    %s152 = sphi 0, %s136
  $region4: #{conv_block_forward.1} parent=0 // loop_header_branch
    %13 = sbr.rel (%p11) target = $region8
  $region5: #{conv_block_forward.1} parent=0 // loop_body
    %s15 = ssub.s32 %s10, 1
    %s16 = ssub.s32 %s10, 2
    %s23 = sadd.s32 1, %s18
    %p24 = scmp.ge.s32.totalorder %s23, 2
    %s25 = scalar_select %p24, 0, %s23
    %s26 = sadd.s32 1, %s17
    %s27 = scalar_select %p24, %s26, %s17
    %p28 = scmp.ge.s32.totalorder %s27, 2
    %s29 = scalar_select %p28, 0, %s27
    %s30 = ssub.s32 %s17, %s29
    %s31 = ssub.s32 %s18, %s25
    %s32 = sor.u32 %s30, %s31
    %p33 = scmp.eq.s32.totalorder %s32, 0
    %s35 = sadd.s32 %s34, 1
    %s36 = scalar_select %p33, %s34, %s35
    %p39 = pneg %p33
    %p40 = scmp.eq.s32.totalorder %s10, 3
    %p41 = por %p39, %p40
    %p42 = scmp.ne.s32.totalorder %s34, %s37
    %p43 = scmp.eq.s32.totalorder %s10, 0
    %p44 = por %p42, %p43
    %p45 = scmp.ne.s32.totalorder %s34, %s37
    %p46 = scmp.eq.s32.totalorder %s15, 3
    %p47 = por %p45, %p46
    %p48 = scmp.ne.s32.totalorder %s37, %s38
    %p49 = scmp.eq.s32.totalorder %s15, 0
    %p50 = por %p48, %p49
    %p51 = scmp.ne.s32.totalorder %s37, %s38
    %p52 = scmp.eq.s32.totalorder %s16, 3
    %p53 = por %p51, %p52
    %p55 = scmp.ne.s32.totalorder %s38, %s54
    %p56 = scmp.eq.s32.totalorder %s16, 0
    %p57 = por %p55, %p56
    %s58 = ssub.s32 %s17, %s29
    %s59 = ssub.s32 %s18, %s25
    %s60 = sor.u32 %s58, %s59
    %p61 = scmp.eq.s32.totalorder %s60, 0
    %s63 = sadd.s32 %s62, 1
    %s64 = scalar_select %p61, %s62, %s63
    %p67 = pneg %p61
    %p68 = scmp.eq.s32.totalorder %s10, 3
    %p69 = por %p67, %p68
    %p70 = scmp.ne.s32.totalorder %s62, %s65
    %p71 = scmp.eq.s32.totalorder %s10, 0
    %p72 = por %p70, %p71
    %p73 = scmp.ne.s32.totalorder %s62, %s65
    %p74 = scmp.eq.s32.totalorder %s15, 3
    %p75 = por %p73, %p74
    %p76 = scmp.ne.s32.totalorder %s65, %s66
    %p77 = scmp.eq.s32.totalorder %s15, 0
    %p78 = por %p76, %p77
    %p79 = scmp.ne.s32.totalorder %s65, %s66
    %p80 = scmp.eq.s32.totalorder %s16, 3
    %p81 = por %p79, %p80
    %p83 = scmp.ne.s32.totalorder %s66, %s82
    %p84 = scmp.eq.s32.totalorder %s16, 0
    %p85 = por %p83, %p84
    %s87 = sadd.s32 %s86, 1
    %p90 = scmp.eq.s32.totalorder %s10, 3
    %p91 = scmp.ne.s32.totalorder %s86, %s88
    %p92 = scmp.eq.s32.totalorder %s10, 0
    %p93 = por %p91, %p92
    %p94 = scmp.ne.s32.totalorder %s86, %s88
    %p95 = scmp.eq.s32.totalorder %s15, 3
    %p96 = por %p94, %p95
    %p97 = scmp.ne.s32.totalorder %s88, %s89
    %p98 = scmp.eq.s32.totalorder %s15, 0
    %p99 = por %p97, %p98
    %p100 = scmp.ne.s32.totalorder %s88, %s89
    %p101 = scmp.eq.s32.totalorder %s16, 3
    %p102 = por %p100, %p101
    %p104 = scmp.ne.s32.totalorder %s89, %s103
    %p105 = scmp.eq.s32.totalorder %s16, 0
    %p106 = por %p104, %p105
    %s108 = sadd.s32 %s107, 1
    %p111 = scmp.eq.s32.totalorder %s10, 3
    %p112 = scmp.ne.s32.totalorder %s107, %s109
    %p113 = scmp.eq.s32.totalorder %s10, 0
    %p114 = por %p112, %p113
    %p115 = scmp.ne.s32.totalorder %s107, %s109
    %p116 = scmp.eq.s32.totalorder %s15, 3
    %p117 = por %p115, %p116
    %p118 = scmp.ne.s32.totalorder %s109, %s110
    %p119 = scmp.eq.s32.totalorder %s15, 0
    %p120 = por %p118, %p119
    %p121 = scmp.ne.s32.totalorder %s109, %s110
    %p122 = scmp.eq.s32.totalorder %s16, 3
    %p123 = por %p121, %p122
    %p125 = scmp.ne.s32.totalorder %s110, %s124
    %p126 = scmp.eq.s32.totalorder %s16, 0
    %p127 = por %p125, %p126
    %s128 = ssub.s32 %s17, %s29
    %s129 = ssub.s32 %s18, %s25
    %s130 = sor.u32 %s128, %s129
    %p131 = scmp.eq.s32.totalorder %s130, 0
    %s133 = sadd.s32 %s132, 1
    %s134 = scalar_select %p131, %s132, %s133
    %p137 = pneg %p131
    %p138 = scmp.eq.s32.totalorder %s10, 3
    %p139 = por %p137, %p138
    %p140 = scmp.ne.s32.totalorder %s132, %s135
    %p141 = scmp.eq.s32.totalorder %s10, 0
    %p142 = por %p140, %p141
    %p143 = scmp.ne.s32.totalorder %s132, %s135
    %p144 = scmp.eq.s32.totalorder %s15, 3
    %p145 = por %p143, %p144
    %p146 = scmp.ne.s32.totalorder %s135, %s136
    %p147 = scmp.eq.s32.totalorder %s15, 0
    %p148 = por %p146, %p147
    %p149 = scmp.ne.s32.totalorder %s135, %s136
    %p150 = scmp.eq.s32.totalorder %s16, 3
    %p151 = por %p149, %p150
    %p153 = scmp.ne.s32.totalorder %s136, %s152
    %p154 = scmp.eq.s32.totalorder %s16, 0
    %p155 = por %p153, %p154
    %p156 = scmp.le.s32.totalorder 1, %s10
    %p157 = scmp.lt.s32.totalorder %s10, 5
    %p158 = pnand %p156, %p157
    %p159 = pneg %p158
    // Predicated region
    $region9: #{conv_block_forward.1} parent=5 // pred_check
      _
    $region10: #{conv_block_forward.1} parent=5 // pred_check_branch
      %161 = sbr.rel (%p158) target = $region12
    $region11: #{conv_block_forward.1} parent=5 // pred_region
      %s162 = ssub.s32 %s10, 1
      // Predicated region
      $region13: #{conv_block_forward.1} parent=11 // pred_check
        %p163 = pneg %p99
      $region14: #{conv_block_forward.1} parent=11 // pred_check_branch
        %165 = sbr.rel (%p163) target = $region16
      $region15: #{conv_block_forward.1} parent=11 // pred_region
        _
      $region16: #{conv_block_forward.1} parent=11 // pred_fallthru
        _
      // Predicated region
      $region17: #{conv_block_forward.1} parent=11 // pred_check
        %p166 = pneg %p120
      $region18: #{conv_block_forward.1} parent=11 // pred_check_branch
        %168 = sbr.rel (%p166) target = $region20
      $region19: #{conv_block_forward.1} parent=11 // pred_region
        _
      $region20: #{conv_block_forward.1} parent=11 // pred_fallthru
        _
    $region12: #{conv_block_forward.1} parent=5 // pred_fallthru
      _
    %p169 = scmp.lt.s32.totalorder %s10, 4
    // Predicated region
    $region21: #{conv_block_forward.1} parent=5 // pred_check
      %p170 = pneg %p169
    $region22: #{conv_block_forward.1} parent=5 // pred_check_branch
      %172 = sbr.rel (%p170) target = $region24
    $region23: #{conv_block_forward.1} parent=5 // pred_region
      // Predicated region
      $region25: #{conv_block_forward.1} parent=23 // pred_check
        %p173 = pneg %p44
      $region26: #{conv_block_forward.1} parent=23 // pred_check_branch
        %175 = sbr.rel (%p173) target = $region28
      $region27: #{conv_block_forward.1} parent=23 // pred_region
        %p176 = scmp.lt.s32.totalorder %s17, 1
        %s177 = scalar_select %p176, %s17, 1
        %p178 = scmp.lt.s32.totalorder %s18, 1
        %s179 = scalar_select %p178, %s18, 1
        %s180 = smul.addr %s177, 2
        %s181 = sadd.s32 %s179, %s180
        %s182 = smul.addr %s181, 4
        %s183 = scalar_lea.vmem %s0, %s182
      $region28: #{conv_block_forward.1} parent=23 // pred_fallthru
        _
      // Predicated region
      $region29: #{conv_block_forward.1} parent=23 // pred_check
        %p184 = pneg %p72
      $region30: #{conv_block_forward.1} parent=23 // pred_check_branch
        %186 = sbr.rel (%p184) target = $region32
      $region31: #{conv_block_forward.1} parent=23 // pred_region
        %p187 = scmp.lt.s32.totalorder %s17, 1
        %s188 = scalar_select %p187, %s17, 1
        %p189 = scmp.lt.s32.totalorder %s18, 1
        %s190 = scalar_select %p189, %s18, 1
        %s191 = smul.addr %s188, 2
        %s192 = sadd.s32 %s190, %s191
        %s193 = smul.addr %s192, 4
        %s194 = scalar_lea.vmem %s1, %s193
      $region32: #{conv_block_forward.1} parent=23 // pred_fallthru
        _
    $region24: #{conv_block_forward.1} parent=5 // pred_fallthru
      _
    %p195 = scmp.le.s32.totalorder 1, %s10
    %p196 = scmp.lt.s32.totalorder %s10, 5
    %p197 = pnand %p195, %p196
    %p198 = pneg %p197
    // Predicated region
    $region33: #{conv_block_forward.1} parent=5 // pred_check
      _
    $region34: #{conv_block_forward.1} parent=5 // pred_check_branch
      %200 = sbr.rel (%p197) target = $region36
    $region35: #{conv_block_forward.1} parent=5 // pred_region
      %s201 = ssub.s32 %s10, 1
      %p202 = scmp.lt.s32.totalorder %s19, 1
      %s203 = scalar_select %p202, %s19, 1
      %p204 = scmp.lt.s32.totalorder %s20, 1
      %s205 = scalar_select %p204, %s20, 1
      %s206 = smul.addr %s203, 2
      %s207 = sadd.s32 %s205, %s206
      %s208 = smul.addr %s207, 4
      %s209 = scalar_lea.vmem %s0, %s208
      %p210 = pneg %p50
      %p211 = pneg %p47
      %p212 = scmp.lt.s32.totalorder %s19, 1
      %s213 = scalar_select %p212, %s19, 1
      %p214 = scmp.lt.s32.totalorder %s20, 1
      %s215 = scalar_select %p214, %s20, 1
      %s216 = smul.addr %s213, 2
      %s217 = sadd.s32 %s215, %s216
      %s218 = smul.addr %s217, 4
      %s219 = scalar_lea.vmem %s1, %s218
      %p220 = pneg %p78
      %p221 = pneg %p75
      %p222 = pneg %p99
      %p223 = pneg %p96
      %p224 = pneg %p120
      %p225 = pneg %p117
      %p226 = pneg %p148
      %p227 = pneg %p145
      %p228 = scmp.lt.s32.totalorder %s19, 1
      %s229 = scalar_select %p228, %s19, 1
      %p230 = scmp.lt.s32.totalorder %s20, 1
      %s231 = scalar_select %p230, %s20, 1
      %s232 = smul.addr %s229, 2
      %s233 = sadd.s32 %s231, %s232
      %s234 = smul.addr %s233, 8
      %s235 = scalar_lea.vmem %s4, %s234
      %p236 = scmp.lt.s32.totalorder %s19, 1
      %s237 = scalar_select %p236, %s19, 1
      %p238 = scmp.lt.s32.totalorder %s20, 1
      %s239 = scalar_select %p238, %s20, 1
      %s240 = smul.addr %s237, 2
      %s241 = sadd.s32 %s239, %s240
      %s242 = smul.addr %s241, 4
      %s243 = scalar_lea.vmem %s0, %s242
      %p244 = scmp.lt.s32.totalorder %s19, 1
      %s245 = scalar_select %p244, %s19, 1
      %p246 = scmp.lt.s32.totalorder %s20, 1
      %s247 = scalar_select %p246, %s20, 1
      %s248 = smul.addr %s245, 2
      %s249 = sadd.s32 %s247, %s248
      %s250 = smul.addr %s249, 4
      %s251 = scalar_lea.vmem %s1, %s250
      %p252 = scmp.lt.s32.totalorder %s19, 1
      %s253 = scalar_select %p252, %s19, 1
      %p254 = scmp.lt.s32.totalorder %s20, 1
      %s255 = scalar_select %p254, %s20, 1
      %s256 = smul.addr %s253, 2
      %s257 = sadd.s32 %s255, %s256
      %s258 = smul.addr %s257, 8
      %s259 = scalar_lea.vmem %s4, %s258
      %v261 = vld [vmem:[%s243] sm:$0xf]
      %v262 = vld [vmem:[%s251] sm:$0xf]
      %264 = vrot.lane.b32.xlu0 %v262, 112
      %v265 = vpop.permute.xlu0 %264
      %vm267 = vcmask 916480
      %v268 = vsel %vm267, 0.0, %v265
      %vm269 = vcmask 130048
      %v270 = vsel %vm269, %v265, 0.0
      %v271 = vmul.f32 %v268, %v268
      %v272 = vmul.f32 %v261, %v261
      %v273 = vmul.f32 %v270, %v270
      %vm274 = vcmask 1043456
      %v275 = vsel %vm274, %v271, 0.0
      %v276 = vrot.slane %v275, 4
      %v277 = vadd.f32 %v275, %v276
      %v278 = vrot.slane %v277, 2
      %v279 = vadd.f32 %v277, %v278
      %v280 = vrot.slane %v279, 1
      %v281 = vadd.f32 %v279, %v280
      %v282 = vsel %vm274, %v272, 0.0
      %v283 = vrot.slane %v282, 4
      %v284 = vadd.f32 %v282, %v283
      %v285 = vrot.slane %v284, 2
      %v286 = vadd.f32 %v284, %v285
      %v287 = vrot.slane %v286, 1
      %v288 = vadd.f32 %v286, %v287
      %v289 = vsel %vm274, %v273, 0.0
      %v290 = vrot.slane %v289, 4
      %v291 = vadd.f32 %v289, %v290
      %v292 = vrot.slane %v291, 2
      %v293 = vadd.f32 %v291, %v292
      %v294 = vrot.slane %v293, 1
      %v295 = vadd.f32 %v293, %v294
      %v296 = vrcp.pop 4.0
      %v297 = vmul.f32 %v281, %v296
      %v298 = vmul.f32 %v288, %v296
      %v299 = vmul.f32 %v295, %v296
      %v300 = vadd.f32 %v297, 1e-08
      %v301 = vadd.f32 %v298, 1e-08
      %v302 = vadd.f32 %v299, 1e-08
      %v303 = vrsqrt.pop %v300
      %v304 = vrsqrt.pop %v301
      %v305 = vrsqrt.pop %v302
      %v306 = vmul.f32 %v268, %v303
      %v307 = vmul.f32 %v261, %v304
      %v308 = vmul.f32 %v270, %v305
      %v309 = vpack.c.bf16 %v306, %v306
      %v310 = vpack.c.bf16 %v307, %v307
      %v311 = vpack.c.bf16 %v308, %v308
      %v312 = vlaneseq
      %v313 = vand.u32 %v312, 127
      %vm314 = vcmp.lt.s32.totalorder %v313, 0
      %v315 = vsub.s32 0, %v313
      %v316 = vsel %vm314, %v315, %v313
      %v317 = vshrl.u32 %v316, 4
      %v318 = vand.u32 %v316, 15
      %v319 = vsub.s32 0, %v318
      %v320 = vsel %vm314, %v319, %v318
      %vm321 = vcmp.ne.s32.totalorder %v320, 0
      %vm322 = vcmp.lt.s32.totalorder %v320, 0
      %vm323 = vmand %vm322, %vm321
      %v324 = vadd.s32 %v320, 16
      %v325 = vsel %vm323, %v324, %v320
      %vm326 = vcmp.ge.s32.totalorder %v325, 1
      %v327 = vsel %vm326, 1, 0
      %v328 = vcvt.s32.f32 %v327
      %v329 = vpack.c.bf16 %v328, %v328
      %vm330 = vcmp.le.s32.totalorder %v325, 14
      %v331 = vsel %vm330, 1, 0
      %v332 = vcvt.s32.f32 %v331
      %v333 = vpack.c.bf16 %v332, %v332
      %335 = vrot.lane.b32.xlu0 %v329, 111
      %v336 = vpop.permute.xlu0 %335
      %v338 = vmul.bf16 %v309, %v336
      %v339 = vmul.bf16 %v310, %v336
      %341 = vrot.lane.b32.xlu0 %v333, 113
      %v342 = vpop.permute.xlu0 %341
      %v344 = vmul.bf16 %v309, %v342
      %v345 = vmul.bf16 %v310, %v342
      %346 = vrot.lane.b32.xlu0 %v329, 127
      %v347 = vpop.permute.xlu0 %346
      %v349 = vmul.bf16 %v309, %v347
      %v350 = vmul.bf16 %v310, %v347
      %351 = vrot.lane.b32.xlu0 %v333, 1
      %v352 = vpop.permute.xlu0 %351
      %v354 = vmul.bf16 %v310, %v352
      %v355 = vmul.bf16 %v311, %v352
      %356 = vrot.lane.b32.xlu0 %v329, 15
      %v357 = vpop.permute.xlu0 %356
      %v359 = vmul.bf16 %v310, %v357
      %v360 = vmul.bf16 %v311, %v357
      %361 = vrot.lane.b32.xlu0 %v333, 17
      %v362 = vpop.permute.xlu0 %361
      %v364 = vmul.bf16 %v310, %v362
      %v365 = vmul.bf16 %v311, %v362
      %v368 = vrot.slane %v309, 6
      %v369 = vrot.slane %v310, 6
      %370 = vrot.lane.b32.xlu0 %v368, 127
      %v371 = vpop.permute.xlu0 %370
      %372 = vrot.lane.b32.xlu0 %v369, 127
      %v373 = vpop.permute.xlu0 %372
      %vm374 = vcmask 1039360
      %v375 = vsel %vm374, %v371, %v373
      %v378 = vrot.slane %v344, 4
      %v379 = vrot.slane %v345, 4
      %380 = vrot.lane.b32.xlu0 %v378, 126
      %v381 = vpop.permute.xlu0 %380
      %382 = vrot.lane.b32.xlu0 %v379, 126
      %v383 = vpop.permute.xlu0 %382
      %vm384 = vcmask 1031168
      %v385 = vsel %vm384, %v381, %v383
      %v388 = vrot.slane %v349, 2
      %v389 = vrot.slane %v350, 2
      %390 = vrot.lane.b32.xlu0 %v388, 112
      %v391 = vpop.permute.xlu0 %390
      %392 = vrot.lane.b32.xlu0 %v389, 112
      %v393 = vpop.permute.xlu0 %392
      %vm394 = vcmask 916480
      %v395 = vsel %vm394, %v391, %v393
      %396 = vrot.lane.b32.xlu0 %v310, 111
      %v397 = vpop.permute.xlu0 %396
      %v400 = vrot.slane %v354, 6
      %v401 = vrot.slane %v355, 6
      %402 = vrot.lane.b32.xlu0 %v400, 110
      %v403 = vpop.permute.xlu0 %402
      %404 = vrot.lane.b32.xlu0 %v401, 110
      %v405 = vpop.permute.xlu0 %404
      %vm406 = vcmask 900096
      %v407 = vsel %vm406, %v403, %v405
      %v410 = vrot.slane %v359, 4
      %v411 = vrot.slane %v360, 4
      %412 = vrot.lane.b32.xlu0 %v410, 96
      %v413 = vpop.permute.xlu0 %412
      %414 = vrot.lane.b32.xlu0 %v411, 96
      %v415 = vpop.permute.xlu0 %414
      %vm416 = vcmask 785408
      %v417 = vsel %vm416, %v413, %v415
      %v419 = vrot.slane %v310, 2
      %v420 = vrot.slane %v311, 2
      %421 = vrot.lane.b32.xlu0 %v419, 95
      %v422 = vpop.permute.xlu0 %421
      %423 = vrot.lane.b32.xlu0 %v420, 95
      %v424 = vpop.permute.xlu0 %423
      %vm425 = vcmask 777216
      %v426 = vsel %vm425, %v422, %v424
      %429 = vrot.lane.b32.xlu0 %v364, 94
      %v430 = vpop.permute.xlu0 %429
      %431 = vrot.lane.b32.xlu0 %v365, 94
      %v432 = vpop.permute.xlu0 %431
      %vm433 = vcmask 769024
      %v434 = vsel %vm433, %v430, %v432
      %vm435 = vcmask 1041408
      %v438 = vsel %vm435, %v338, %v375
      %v441 = vsel %vm435, %v339, %v373
      %v443 = vsel %vm274, %v438, %v385
      %v445 = vsel %vm274, %v441, %v383
      %vm446 = vcmask 1045504
      %v448 = vsel %vm446, %v443, %v395
      %v450 = vsel %vm446, %v445, %v393
      %v453 = vsel %vm435, %v397, %v403
      %v455 = vsel %vm435, %v397, %v407
      %v457 = vsel %vm274, %v453, %v413
      %v459 = vsel %vm274, %v455, %v417
      %v461 = vsel %vm446, %v457, %v422
      %v463 = vsel %vm446, %v459, %v426
      %v464 = vld [vmem:[%s2] sm:$0xf]
      %v465 = vld [vmem:[%s3] sm:$0xff]
      %467 = vset.pattern.permute.xlu0 0
      %468 = vperm.xlu0 %467, %v465
      %v469 = vpop.permute.xlu0 %468
      %475 = vrot.lane.b32.xlu0 %v448, 17
      %v476 = vpop.permute.xlu0 %475
      %477 = vrot.lane.b32.xlu0 %v450, 17
      %v478 = vpop.permute.xlu0 %477
      %479 = vrot.lane.b32.xlu0 %v461, 17
      %v480 = vpop.permute.xlu0 %479
      %481 = vrot.lane.b32.xlu0 %v463, 17
      %v482 = vpop.permute.xlu0 %481
      %483 = vrot.lane.b32.xlu0 %v430, 17
      %v484 = vpop.permute.xlu0 %483
      %485 = vrot.lane.b32.xlu0 %v434, 17
      %v486 = vpop.permute.xlu0 %485
      %vm487 = vcmask 138240
      %v488 = vsel %vm487, %v476, %v478
      %v489 = vsel %vm487, %v480, %v482
      %v490 = vsel %vm487, %v484, %v486
      %vm493 = vcmask 293888
      %v495 = vsel %vm493, %v464, 0
      %v498 = vsel %vm435, %v490, 0
      %500 = vmatprep.subr.bf16.mxu0 0
      %501 = vmatpush1.bf16.msra.mxu0 %v488
      %502 = vmatprep.subr.bf16.mxu0 0
      %503 = vmatpush1.bf16.msra.mxu0 %v489
      %504 = vmatprep.subr.bf16.mxu0 0
      %505 = vmatpush1.bf16.msra.mxu0 %v498
      %506 = vmatprep.subr.bf16.mxu0 0
      %507 = vmatpush1.bf16.msra.mxu0 0
      %508 = vmatprep.subr.bf16.mxu0 0
      %509 = vmatpush1.bf16.msra.mxu0 0
      %510 = vmatprep.subr.bf16.mxu0 0
      %511 = vmatpush1.bf16.msra.mxu0 0
      %512 = vmatprep.subr.bf16.mxu0 0
      %513 = vmatpush1.bf16.msra.mxu0 0
      %514 = vmatprep.subr.bf16.mxu0 0
      %515 = vmatpush1.bf16.msra.mxu0 0
      %516 = vmatprep.subr.bf16.mxu0 0
      %517 = vmatpush1.bf16.msra.mxu0 0
      %518 = vmatprep.subr.bf16.mxu0 0
      %519 = vmatpush1.bf16.msra.mxu0 0
      %520 = vmatprep.subr.bf16.mxu0 0
      %521 = vmatpush1.bf16.msra.mxu0 0
      %522 = vmatprep.subr.bf16.mxu0 0
      %523 = vmatpush1.bf16.msra.mxu0 0
      %524 = vmatprep.subr.bf16.mxu0 0
      %525 = vmatpush1.bf16.msra.mxu0 0
      %526 = vmatprep.subr.bf16.mxu0 0
      %527 = vmatpush1.bf16.msra.mxu0 0
      %528 = vmatprep.subr.bf16.mxu0 0
      %529 = vmatpush1.bf16.msra.mxu0 0
      %530 = vmatprep.subr.bf16.mxu0 0
      %531 = vmatpush1.bf16.msra.mxu0 0
      %532 = vmatprep.mubr.bf16.mxu0 0
      %533 = vmatmul.mubr.bf16.gmra.mrb[0].mxu0 %v495
      %v534 = vpop.f32.mrb[0].mxu0
      %v535 = vadd.f32 %v469, %v534
      %v536 = vpop.f32.mrb[0].mxu0
      %v537 = vpop.f32.mrb[0].mxu0
      %v538 = vpop.f32.mrb[0].mxu0
      %539 = vdwg.mxu0
      %vm540 = vcmp.ge.f32.partialorder %v535, 0.0
      %v541 = vmul.f32 %v535, 0.2
      %v542 = vsel %vm540, %v535, %v541
      %543 = vst [vmem:[%s259] sm:$0xff] %v542
      %p544 = scmp.lt.s32.totalorder %s19, 1
      %s545 = scalar_select %p544, %s19, 1
      %p546 = scmp.lt.s32.totalorder %s20, 1
      %s547 = scalar_select %p546, %s20, 1
      %s548 = smul.addr %s545, 2
      %s549 = sadd.s32 %s547, %s548
      %s550 = smul.addr %s549, 8
      %s551 = scalar_lea.vmem %s4, %s550
      // Predicated region
      $region37: #{conv_block_forward.1} parent=35 // pred_check
        %p552 = pneg %p145
      $region38: #{conv_block_forward.1} parent=35 // pred_check_branch
        %554 = sbr.rel (%p552) target = $region40
      $region39: #{conv_block_forward.1} parent=35 // pred_region
        _
      $region40: #{conv_block_forward.1} parent=35 // pred_fallthru
        _
    $region36: #{conv_block_forward.1} parent=5 // pred_fallthru
      _
    %p555 = scmp.le.s32.totalorder 2, %s10
    // Predicated region
    $region41: #{conv_block_forward.1} parent=5 // pred_check
      %p556 = pneg %p555
    $region42: #{conv_block_forward.1} parent=5 // pred_check_branch
      %558 = sbr.rel (%p556) target = $region44
    $region43: #{conv_block_forward.1} parent=5 // pred_region
      %s559 = ssub.s32 %s10, 2
      // Predicated region
      $region45: #{conv_block_forward.1} parent=43 // pred_check
        %p560 = pneg %p151
      $region46: #{conv_block_forward.1} parent=43 // pred_check_branch
        %562 = sbr.rel (%p560) target = $region48
      $region47: #{conv_block_forward.1} parent=43 // pred_region
        %p563 = scmp.lt.s32.totalorder %s21, 1
        %s564 = scalar_select %p563, %s21, 1
        %p565 = scmp.lt.s32.totalorder %s22, 1
        %s566 = scalar_select %p565, %s22, 1
        %s567 = smul.addr %s564, 2
        %s568 = sadd.s32 %s566, %s567
        %s569 = smul.addr %s568, 8
        %s570 = scalar_lea.vmem %s4, %s569
      $region48: #{conv_block_forward.1} parent=43 // pred_fallthru
        _
    $region44: #{conv_block_forward.1} parent=5 // pred_fallthru
      _
  $region6: #{conv_block_forward.1} parent=0 // loop_footer
    %s14 = sadd.s32 1, %s10
  $region7: #{conv_block_forward.1} parent=0 // loop_footer_branch
    %9 = sbr.rel target = $region3
  $region8: #{conv_block_forward.1} parent=0 // loop_exit
    _

</llo_original>
